<compile_context>
chip_gen: v5e
topology: v5e:2x2
jax: 0.10.0
libtpu: 0.0.40
codegen_flags: <defaults>
</compile_context>

<pallas_src>
import jax
import jax.numpy as jnp
from jax.experimental import pallas as pl
from jax.experimental.pallas import tpu as pltpu


def _mlp_kernel(xT_ref, w1_ref, b1_ref, w2_ref, b2_ref, w3_ref, b3_ref, outT_ref):
    xT = xT_ref[...]                                                    # (F, tb) bf16
    # Layer 1: Linear + ReLU (MXU bf16 operands, f32 accumulation)
    h = jnp.dot(w1_ref[...], xT, preferred_element_type=jnp.float32)   # (H1, tb)
    h = jnp.maximum(h + b1_ref[...], 0.0)
    # Layer 2: Linear + ReLU
    h = jnp.dot(w2_ref[...], h.astype(jnp.bfloat16),
                preferred_element_type=jnp.float32)                    # (H2, tb)
    h = jnp.maximum(h + b2_ref[...], 0.0)
    # Output layer: Linear + Sigmoid (lane-dense (1, tb) output).
    z = jnp.dot(w3_ref[...], h.astype(jnp.bfloat16),
                preferred_element_type=jnp.float32) + b3_ref[...]      # (1, tb)
    outT_ref[...] = 1.0 / (1.0 + jnp.exp(-z))


def binary_classifier_forward(x, params, tb=8192):
    """x: [B, input_size] float32/bfloat16. params: torch-layout weights.

    Returns [B, output_size] float32 probabilities.
    """
    B, F = x.shape
    out_size = params["w3"].shape[0]

    # Feed x transposed + bf16 so the HBM stream is half-width and lane-dense.
    xT = x.astype(jnp.bfloat16).T                                       # (F, B)

    if B <= tb:
        tb = B                    # single block; full-dim blocks are always legal
    else:
        tb = max((tb // 128) * 128, 128)   # batch is the lane dim -> 128-aligned
    grid = (pl.cdiv(B, tb),)      # ragged last block masked by Pallas (no pad copy)

    # Advisory cost model for XLA's scheduler.
    H1 = params["w1"].shape[0]
    H2 = params["w2"].shape[0]
    flops = 2 * B * (F * H1 + H1 * H2 + H2 * out_size)
    bytes_accessed = (
        2 * B * F + 4 * B * out_size                                    # x (bf16), out
        + 2 * (F * H1 + H1 * H2 + H2 * out_size)                        # bf16 weights
        + 4 * (H1 + H2 + out_size)                                      # f32 biases
    )
    cost = pl.CostEstimate(flops=flops, transcendentals=B * out_size,
                           bytes_accessed=bytes_accessed)

    # Weights & biases: full-array blocks with constant index_map -> loaded once
    # and resident in VMEM across all grid steps. x / out: streamed per tile.
    def const_spec(shape):
        return pl.BlockSpec(shape, lambda i: (0,) * len(shape))

    outT = pl.pallas_call(
        _mlp_kernel,
        out_shape=jax.ShapeDtypeStruct((out_size, B), jnp.float32),
        grid=grid,
        in_specs=[
            pl.BlockSpec((F, tb), lambda i: (0, i)),
            const_spec(params["w1"].shape),
            const_spec(params["b1"].shape),
            const_spec(params["w2"].shape),
            const_spec(params["b2"].shape),
            const_spec(params["w3"].shape),
            const_spec(params["b3"].shape),
        ],
        out_specs=pl.BlockSpec((out_size, tb), lambda i: (0, i)),
        compiler_params=pltpu.CompilerParams(
            dimension_semantics=("parallel",),
        ),
        cost_estimate=cost,
    )(xT, params["w1"], params["b1"], params["w2"], params["b2"],
      params["w3"], params["b3"])

    return outT.T                                                        # (B, out)


def init_params(key, input_size, hidden_layers, output_size=1):
    """Torch-style init. Weights [out, in] in bf16, biases [out, 1] in f32."""
    dims = [input_size] + list(hidden_layers) + [output_size]
    params = {}
    for i in range(len(dims) - 1):
        key, kw, kb = jax.random.split(key, 3)
        bound = float(dims[i]) ** -0.5
        w = jax.random.uniform(kw, (dims[i + 1], dims[i]), jnp.float32, -bound, bound)
        b = jax.random.uniform(kb, (dims[i + 1], 1), jnp.float32, -bound, bound)
        params[f"w{i + 1}"] = w.astype(jnp.bfloat16)
        params[f"b{i + 1}"] = b
    return params


def reference_forward(x, params):
    """Pure-JAX reference mimicking the kernel's bf16-operand / f32-accum math."""
    h = jnp.dot(x.astype(jnp.bfloat16), params["w1"].T,
                preferred_element_type=jnp.float32) + params["b1"].T
    h = jnp.maximum(h, 0.0)
    h = jnp.dot(h.astype(jnp.bfloat16), params["w2"].T,
                preferred_element_type=jnp.float32) + params["b2"].T
    h = jnp.maximum(h, 0.0)
    z = jnp.dot(h.astype(jnp.bfloat16), params["w3"].T,
                preferred_element_type=jnp.float32) + params["b3"].T
    return 1.0 / (1.0 + jnp.exp(-z))


if __name__ == "__main__":
    key = jax.random.PRNGKey(0)
    input_size = 32
    hidden_layers = [64, 32]
    output_size = 1

    key, kp = jax.random.split(key)
    params = init_params(kp, input_size, hidden_layers, output_size)

    # --- Small demo batch (module's expected usage); single full-dim block ---
    batch = 8
    key, kx = jax.random.split(key)
    x = jax.random.normal(kx, (batch, input_size), jnp.float32)

    out = binary_classifier_forward(x, params)
    out = jax.block_until_ready(out)
    ref = reference_forward(x, params)
    assert out.shape == (batch, output_size)
    assert jnp.allclose(out, ref, atol=2e-3, rtol=2e-3)

    # --- Larger batch with a small tile to exercise the multi-block grid and
    #     the ragged (masked) last block: grid = cdiv(1000, 256) = 4 ---
    batch_big = 1000
    key, kx2 = jax.random.split(key)
    x_big = jax.random.normal(kx2, (batch_big, input_size), jnp.float32)

    out_big = binary_classifier_forward(x_big, params, tb=256)
    out_big = jax.block_until_ready(out_big)
    ref_big = reference_forward(x_big, params)
    assert out_big.shape == (batch_big, output_size)
    assert jnp.allclose(out_big, ref_big, atol=2e-3, rtol=2e-3)

    print("KERNEL_OK")
</pallas_src>

<mosaic_0001>
module attributes {stable_mosaic.version = 11 : i64} {
  func.func @_mlp_kernel(%arg0: i32, %arg1: memref<32x8xbf16, #tpu.memory_space<vmem>>, %arg2: memref<64x32xbf16, #tpu.memory_space<vmem>>, %arg3: memref<64x1xf32, #tpu.memory_space<vmem>>, %arg4: memref<32x64xbf16, #tpu.memory_space<vmem>>, %arg5: memref<32x1xf32, #tpu.memory_space<vmem>>, %arg6: memref<1x32xbf16, #tpu.memory_space<vmem>>, %arg7: memref<1x1xf32, #tpu.memory_space<vmem>>, %arg8: memref<1x8xf32, #tpu.memory_space<vmem>>) attributes {dimension_semantics = [#tpu.dimension_semantics<parallel>], iteration_bounds = array<i64: 1>, scalar_prefetch = 0 : i64, scratch_operands = 0 : i64, tpu.core_type = #tpu.core_type<tc>, window_params = [{transform_indices = @transform_0, window_bounds = array<i64: 32, 8>}, {pipeline_mode = #tpu.pipeline_mode<synchronous>, transform_indices = @transform_1, window_bounds = array<i64: 64, 32>}, {pipeline_mode = #tpu.pipeline_mode<synchronous>, transform_indices = @transform_2, window_bounds = array<i64: 64, 1>}, {pipeline_mode = #tpu.pipeline_mode<synchronous>, transform_indices = @transform_3, window_bounds = array<i64: 32, 64>}, {pipeline_mode = #tpu.pipeline_mode<synchronous>, transform_indices = @transform_4, window_bounds = array<i64: 32, 1>}, {pipeline_mode = #tpu.pipeline_mode<synchronous>, transform_indices = @transform_5, window_bounds = array<i64: 1, 32>}, {pipeline_mode = #tpu.pipeline_mode<synchronous>, transform_indices = @transform_6, window_bounds = array<i64: 1, 1>}, {transform_indices = @transform_7, window_bounds = array<i64: 1, 8>}]} {
    %c0 = arith.constant 0 : index
    %c0_0 = arith.constant 0 : index
    %0 = vector.load %arg1[%c0, %c0_0] : memref<32x8xbf16, #tpu.memory_space<vmem>>, vector<32x8xbf16>
    %c0_1 = arith.constant 0 : index
    %c0_2 = arith.constant 0 : index
    %1 = vector.load %arg2[%c0_1, %c0_2] : memref<64x32xbf16, #tpu.memory_space<vmem>>, vector<64x32xbf16>
    %cst = arith.constant dense<0.000000e+00> : vector<64x8xf32>
    %2 = tpu.matmul %1, %0, %cst {dimension_numbers = #tpu.dot_dimension_numbers<[1], [0], [0], [1], [0, 0, 1, 1], [], []>} : vector<64x32xbf16>, vector<32x8xbf16>, vector<64x8xf32> -> vector<64x8xf32>
    %c0_3 = arith.constant 0 : index
    %c0_4 = arith.constant 0 : index
    %3 = vector.load %arg3[%c0_3, %c0_4] : memref<64x1xf32, #tpu.memory_space<vmem>>, vector<64x1xf32>
    %4 = vector.broadcast %3 : vector<64x1xf32> to vector<64x8xf32>
    %5 = arith.addf %2, %4 : vector<64x8xf32>
    %cst_5 = arith.constant 0.000000e+00 : f32
    %6 = vector.broadcast %cst_5 : f32 to vector<64x8xf32>
    %7 = arith.maximumf %5, %6 : vector<64x8xf32>
    %c0_6 = arith.constant 0 : index
    %c0_7 = arith.constant 0 : index
    %8 = vector.load %arg4[%c0_6, %c0_7] : memref<32x64xbf16, #tpu.memory_space<vmem>>, vector<32x64xbf16>
    %9 = arith.truncf %7 : vector<64x8xf32> to vector<64x8xbf16>
    %cst_8 = arith.constant dense<0.000000e+00> : vector<32x8xf32>
    %10 = tpu.matmul %8, %9, %cst_8 {dimension_numbers = #tpu.dot_dimension_numbers<[1], [0], [0], [1], [0, 0, 1, 1], [], []>} : vector<32x64xbf16>, vector<64x8xbf16>, vector<32x8xf32> -> vector<32x8xf32>
    %c0_9 = arith.constant 0 : index
    %c0_10 = arith.constant 0 : index
    %11 = vector.load %arg5[%c0_9, %c0_10] : memref<32x1xf32, #tpu.memory_space<vmem>>, vector<32x1xf32>
    %12 = vector.broadcast %11 : vector<32x1xf32> to vector<32x8xf32>
    %13 = arith.addf %10, %12 : vector<32x8xf32>
    %cst_11 = arith.constant 0.000000e+00 : f32
    %14 = vector.broadcast %cst_11 : f32 to vector<32x8xf32>
    %15 = arith.maximumf %13, %14 : vector<32x8xf32>
    %c0_12 = arith.constant 0 : index
    %c0_13 = arith.constant 0 : index
    %16 = vector.load %arg6[%c0_12, %c0_13] : memref<1x32xbf16, #tpu.memory_space<vmem>>, vector<1x32xbf16>
    %17 = arith.truncf %15 : vector<32x8xf32> to vector<32x8xbf16>
    %cst_14 = arith.constant dense<0.000000e+00> : vector<1x8xf32>
    %18 = tpu.matmul %16, %17, %cst_14 {dimension_numbers = #tpu.dot_dimension_numbers<[1], [0], [0], [1], [0, 0, 1, 1], [], []>} : vector<1x32xbf16>, vector<32x8xbf16>, vector<1x8xf32> -> vector<1x8xf32>
    %c0_15 = arith.constant 0 : index
    %c0_16 = arith.constant 0 : index
    %19 = vector.load %arg7[%c0_15, %c0_16] : memref<1x1xf32, #tpu.memory_space<vmem>>, vector<1x1xf32>
    %20 = vector.broadcast %19 : vector<1x1xf32> to vector<1x8xf32>
    %21 = arith.addf %18, %20 : vector<1x8xf32>
    %cst_17 = arith.constant 0.000000e+00 : f32
    %22 = vector.broadcast %cst_17 : f32 to vector<1x8xf32>
    %23 = arith.subf %22, %21 : vector<1x8xf32>
    %24 = math.exp %23 : vector<1x8xf32>
    %cst_18 = arith.constant 1.000000e+00 : f32
    %25 = vector.broadcast %cst_18 : f32 to vector<1x8xf32>
    %26 = arith.addf %25, %24 : vector<1x8xf32>
    %cst_19 = arith.constant 1.000000e+00 : f32
    %27 = vector.broadcast %cst_19 : f32 to vector<1x8xf32>
    %28 = arith.divf %27, %26 : vector<1x8xf32>
    %c0_20 = arith.constant 0 : index
    %c0_21 = arith.constant 0 : index
    %29 = vector.load %arg8[%c0_20, %c0_21] : memref<1x8xf32, #tpu.memory_space<vmem>>, vector<1x8xf32>
    tpu.vector_store %arg8[%c0_20, %c0_21], %28 {strides = array<i32>} : memref<1x8xf32, #tpu.memory_space<vmem>>, vector<1x8xf32>,
    return
  }
  func.func @transform_0(%arg0: i32) -> (i32, i32) {
    %c0_i32 = arith.constant 0 : i32
    %c0_i32_0 = arith.constant 0 : i32
    return %c0_i32, %arg0 : i32, i32
  }
  func.func @transform_1(%arg0: i32) -> (i32, i32) {
    %c0_i32 = arith.constant 0 : i32
    %c0_i32_0 = arith.constant 0 : i32
    %c0_i32_1 = arith.constant 0 : i32
    return %c0_i32, %c0_i32_0 : i32, i32
  }
  func.func @transform_2(%arg0: i32) -> (i32, i32) {
    %c0_i32 = arith.constant 0 : i32
    %c0_i32_0 = arith.constant 0 : i32
    %c0_i32_1 = arith.constant 0 : i32
    return %c0_i32, %c0_i32_0 : i32, i32
  }
  func.func @transform_3(%arg0: i32) -> (i32, i32) {
    %c0_i32 = arith.constant 0 : i32
    %c0_i32_0 = arith.constant 0 : i32
    %c0_i32_1 = arith.constant 0 : i32
    return %c0_i32, %c0_i32_0 : i32, i32
  }
  func.func @transform_4(%arg0: i32) -> (i32, i32) {
    %c0_i32 = arith.constant 0 : i32
    %c0_i32_0 = arith.constant 0 : i32
    %c0_i32_1 = arith.constant 0 : i32
    return %c0_i32, %c0_i32_0 : i32, i32
  }
  func.func @transform_5(%arg0: i32) -> (i32, i32) {
    %c0_i32 = arith.constant 0 : i32
    %c0_i32_0 = arith.constant 0 : i32
    %c0_i32_1 = arith.constant 0 : i32
    return %c0_i32, %c0_i32_0 : i32, i32
  }
  func.func @transform_6(%arg0: i32) -> (i32, i32) {
    %c0_i32 = arith.constant 0 : i32
    %c0_i32_0 = arith.constant 0 : i32
    %c0_i32_1 = arith.constant 0 : i32
    return %c0_i32, %c0_i32_0 : i32, i32
  }
  func.func @transform_7(%arg0: i32) -> (i32, i32) {
    %c0_i32 = arith.constant 0 : i32
    %c0_i32_0 = arith.constant 0 : i32
    return %c0_i32, %arg0 : i32, i32
  }
}

</mosaic_0001>

<llo_original>
// kernel: tpu_custom_call.1
$region0: #{tpu_custom_call.1}
  #allocation0 [shape = 'u32[]', space=smem, size = 0x4, offset = 0x4, fixed_abs, tag = 'smem constant byte address 0x4 - core index']
  #allocation1 [shape = 'u32[72,128]{1,0:T(1,128)}', space=vmem, size = 0x9000, scoped, tag = 'internal scratch']
  #allocation2 [shape = 'f32[1,1]{1,0:T(1,128)S(1)}', space=vmem, size = 0x200, scoped, tag = 'scoped memory for tpu_custom_call.1']
  %s0 = inlined_call_operand.vmem [shape: bf16[32,8], index: 0, kind: input, shape index: {}]
  %s1 = inlined_call_operand.vmem [shape: bf16[64,32], index: 1, kind: input, shape index: {}]
  %s2 = inlined_call_operand.vmem [shape: f32[64,1], index: 2, kind: input, shape index: {}]
  %s3 = inlined_call_operand.vmem [shape: bf16[32,64], index: 3, kind: input, shape index: {}]
  %s4 = inlined_call_operand.vmem [shape: f32[32,1], index: 4, kind: input, shape index: {}]
  %s5 = inlined_call_operand.vmem [shape: bf16[1,32], index: 5, kind: input, shape index: {}]
  %s6 = inlined_call_operand.<no memory space> [shape: f32[1,1], index: 6, kind: input, shape index: {}]
  %s7 = inlined_call_operand.hbm [shape: f32[1,8], index: 7, kind: output, shape index: {}]
  %s8 = sld [smem:[#allocation0]]
  $region38: #{tpu_custom_call.1} parent=0
    _
  %s10 = ssub.s32 1, %s8
  %s11 = scalar_select 0, %s10, %s8
  %v12 = vstv %s6
  %13 = vst [vmem:[#allocation2] sm:$0x1] %v12
  $region1: #{tpu_custom_call.1} parent=0
    #allocation3 [shape = 'u8[512]{0}', space=vmem, size = 0x400, scoped, tag = 'output window, operand 0, single buffered']
    #allocation4 [shape = 's32[1]{0}', space=sflag, size = 0x4, scoped, tag = 'scoped memory for tpu_custom_call.1']
    %14 = vsyncpa [#allocation4], 0
    // Predicated region
    $region2: #{tpu_custom_call.1} parent=1 // pred_check
      _
    $region3: #{tpu_custom_call.1} parent=1 // pred_check_branch
      %16 = sbr.rel (0) target = $region5
    $region4: #{tpu_custom_call.1} parent=1 // pred_region
      _
    $region5: #{tpu_custom_call.1} parent=1 // pred_fallthru
      _
    // Predicated region
    $region6: #{tpu_custom_call.1} parent=1 // pred_check
      _
    $region7: #{tpu_custom_call.1} parent=1 // pred_check_branch
      %18 = sbr.rel (0) target = $region9
    $region8: #{tpu_custom_call.1} parent=1 // pred_region
      _
    $region9: #{tpu_custom_call.1} parent=1 // pred_fallthru
      _
    // Predicated region
    $region10: #{tpu_custom_call.1} parent=1 // pred_check
      _
    $region11: #{tpu_custom_call.1} parent=1 // pred_check_branch
      %20 = sbr.rel (0) target = $region13
    $region12: #{tpu_custom_call.1} parent=1 // pred_region
      _
    $region13: #{tpu_custom_call.1} parent=1 // pred_fallthru
      _
    // Predicated region
    $region14: #{tpu_custom_call.1} parent=1 // pred_check
      _
    $region15: #{tpu_custom_call.1} parent=1 // pred_check_branch
      %22 = sbr.rel (0) target = $region17
    $region16: #{tpu_custom_call.1} parent=1 // pred_region
      _
    $region17: #{tpu_custom_call.1} parent=1 // pred_fallthru
      _
    // Predicated region
    $region18: #{tpu_custom_call.1} parent=1 // pred_check
      _
    $region19: #{tpu_custom_call.1} parent=1 // pred_check_branch
      %24 = sbr.rel (0) target = $region21
    $region20: #{tpu_custom_call.1} parent=1 // pred_region
      _
    $region21: #{tpu_custom_call.1} parent=1 // pred_fallthru
      _
    // Predicated region
    $region22: #{tpu_custom_call.1} parent=1 // pred_check
      _
    $region23: #{tpu_custom_call.1} parent=1 // pred_check_branch
      %26 = sbr.rel (0) target = $region25
    $region24: #{tpu_custom_call.1} parent=1 // pred_region
      _
    $region25: #{tpu_custom_call.1} parent=1 // pred_fallthru
      _
    // Predicated region
    $region26: #{tpu_custom_call.1} parent=1 // pred_check
      _
    $region27: #{tpu_custom_call.1} parent=1 // pred_check_branch
      %28 = sbr.rel (0) target = $region29
    $region28: #{tpu_custom_call.1} parent=1 // pred_region
      _
    $region29: #{tpu_custom_call.1} parent=1 // pred_fallthru
      _
    %v30 = vld [vmem:[%s0] sm:$0xf]
    %v31 = vld [vmem:[%s0 + $0x4] sm:$0xf]
    %v32 = vld [vmem:[%s0 + $0x8] sm:$0xf]
    %v33 = vld [vmem:[%s0 + $0xc] sm:$0xf]
    %v34 = vld [vmem:[%s1] sm:$0xf]
    %v35 = vld [vmem:[%s1 + $0x4] sm:$0xf]
    %v36 = vld [vmem:[%s1 + $0x8] sm:$0xf]
    %v37 = vld [vmem:[%s1 + $0xc] sm:$0xf]
    %v38 = vld [vmem:[%s1 + $0x10] sm:$0xf]
    %v39 = vld [vmem:[%s1 + $0x14] sm:$0xf]
    %v40 = vld [vmem:[%s1 + $0x18] sm:$0xf]
    %v41 = vld [vmem:[%s1 + $0x1c] sm:$0xf]
    %v42 = vld [vmem:[%s2] sm:$0xff]
    %v43 = vld [vmem:[%s2 + $0x8] sm:$0xff]
    %v44 = vld [vmem:[%s2 + $0x10] sm:$0xff]
    %v45 = vld [vmem:[%s2 + $0x18] sm:$0xff]
    %v46 = vld [vmem:[%s2 + $0x20] sm:$0xff]
    %v47 = vld [vmem:[%s2 + $0x28] sm:$0xff]
    %v48 = vld [vmem:[%s2 + $0x30] sm:$0xff]
    %v49 = vld [vmem:[%s2 + $0x38] sm:$0xff]
    %51 = vset.pattern.permute.xlu0 0
    %52 = vperm.xlu0 %51, %v42
    %v53 = vpop.permute.xlu0 %52
    %56 = vset.pattern.permute.xlu0 0
    %57 = vperm.xlu0 %56, %v43
    %v58 = vpop.permute.xlu0 %57
    %61 = vset.pattern.permute.xlu0 0
    %62 = vperm.xlu0 %61, %v44
    %v63 = vpop.permute.xlu0 %62
    %66 = vset.pattern.permute.xlu0 0
    %67 = vperm.xlu0 %66, %v45
    %v68 = vpop.permute.xlu0 %67
    %71 = vset.pattern.permute.xlu0 0
    %72 = vperm.xlu0 %71, %v46
    %v73 = vpop.permute.xlu0 %72
    %76 = vset.pattern.permute.xlu0 0
    %77 = vperm.xlu0 %76, %v47
    %v78 = vpop.permute.xlu0 %77
    %81 = vset.pattern.permute.xlu0 0
    %82 = vperm.xlu0 %81, %v48
    %v83 = vpop.permute.xlu0 %82
    %86 = vset.pattern.permute.xlu0 0
    %87 = vperm.xlu0 %86, %v49
    %v88 = vpop.permute.xlu0 %87
    %v98 = vunpack.c.l.b16 %v34
    %v99 = vunpack.c.l.b16 %v35
    %v100 = vunpack.c.l.b16 %v36
    %v101 = vunpack.c.l.b16 %v37
    %v102 = vunpack.c.l.b16 %v38
    %v103 = vunpack.c.l.b16 %v39
    %v104 = vunpack.c.l.b16 %v40
    %v105 = vunpack.c.l.b16 %v41
    %v106 = vpack.c.b16 %v99, %v98
    %v107 = vpack.c.b16 %v101, %v100
    %v108 = vpack.c.b16 %v103, %v102
    %v109 = vpack.c.b16 %v105, %v104
    %v114 = vunpack.c.l.b16 %v30
    %v115 = vunpack.c.l.b16 %v31
    %v116 = vunpack.c.l.b16 %v32
    %v117 = vunpack.c.l.b16 %v33
    %v118 = vpack.c.b16 %v115, %v114
    %v119 = vpack.c.b16 %v117, %v116
    %vm122 = vcmask 261120
    %v124 = vsel %vm122, %v106, 0
    %v127 = vsel %vm122, %v107, 0
    %v130 = vsel %vm122, %v108, 0
    %v133 = vsel %vm122, %v109, 0
    %135 = vmatpush.bf16.msra.mxu0 0
    %136 = vmatpush.bf16.msra.mxu0 0
    %137 = vmatpush.bf16.msra.mxu0 0
    %138 = vmatpush.bf16.msra.mxu0 0
    %139 = vmatpush.bf16.msra.mxu0 0
    %140 = vmatpush.bf16.msra.mxu0 0
    %141 = vmatpush.bf16.msra.mxu0 %v119
    %142 = vmatpush.bf16.msra.mxu0 %v118
    %143 = vmatmul.bf16.gmra.mxu0 %v124
    %v144 = vpop.f32.mrf.mxu0
    %v145 = vadd.f32 %v53, %v144
    %v146 = vpop.f32.mrf.mxu0
    %v147 = vadd.f32 %v58, %v146
    %148 = vmatmul.bf16.gmra.mxu0 %v127
    %v149 = vpop.f32.mrf.mxu0
    %v150 = vadd.f32 %v63, %v149
    %v151 = vpop.f32.mrf.mxu0
    %v152 = vadd.f32 %v68, %v151
    %153 = vmatmul.bf16.gmra.mxu0 %v130
    %v154 = vpop.f32.mrf.mxu0
    %v155 = vadd.f32 %v73, %v154
    %v156 = vpop.f32.mrf.mxu0
    %v157 = vadd.f32 %v78, %v156
    %158 = vmatmul.bf16.gmra.mxu0 %v133
    %v159 = vpop.f32.mrf.mxu0
    %v160 = vadd.f32 %v83, %v159
    %v161 = vpop.f32.mrf.mxu0
    %v162 = vadd.f32 %v88, %v161
    %163 = vdwg.mxu0
    %v164 = vmax.f32 %v145, 0.0
    %v165 = vmax.f32 %v147, 0.0
    %v166 = vmax.f32 %v150, 0.0
    %v167 = vmax.f32 %v152, 0.0
    %v168 = vmax.f32 %v155, 0.0
    %v169 = vmax.f32 %v157, 0.0
    %v170 = vmax.f32 %v160, 0.0
    %v171 = vmax.f32 %v162, 0.0
    %v172 = vld [vmem:[%s3] sm:$0xf]
    %v173 = vld [vmem:[%s3 + $0x4] sm:$0xf]
    %v174 = vld [vmem:[%s3 + $0x8] sm:$0xf]
    %v175 = vld [vmem:[%s3 + $0xc] sm:$0xf]
    %v176 = vpack.c.bf16 %v165, %v164
    %v177 = vpack.c.bf16 %v167, %v166
    %v178 = vpack.c.bf16 %v169, %v168
    %v179 = vpack.c.bf16 %v171, %v170
    %v180 = vld [vmem:[%s4] sm:$0xff]
    %v181 = vld [vmem:[%s4 + $0x8] sm:$0xff]
    %v182 = vld [vmem:[%s4 + $0x10] sm:$0xff]
    %v183 = vld [vmem:[%s4 + $0x18] sm:$0xff]
    %185 = vset.pattern.permute.xlu0 0
    %186 = vperm.xlu0 %185, %v180
    %v187 = vpop.permute.xlu0 %186
    %190 = vset.pattern.permute.xlu0 0
    %191 = vperm.xlu0 %190, %v181
    %v192 = vpop.permute.xlu0 %191
    %195 = vset.pattern.permute.xlu0 0
    %196 = vperm.xlu0 %195, %v182
    %v197 = vpop.permute.xlu0 %196
    %200 = vset.pattern.permute.xlu0 0
    %201 = vperm.xlu0 %200, %v183
    %v202 = vpop.permute.xlu0 %201
    %v208 = vunpack.c.l.b16 %v172
    %v209 = vunpack.c.l.b16 %v173
    %v210 = vunpack.c.l.b16 %v174
    %v211 = vunpack.c.l.b16 %v175
    %v212 = vpack.c.b16 %v209, %v208
    %v213 = vpack.c.b16 %v211, %v210
    %vm214 = vcmask 523264
    %v216 = vsel %vm214, %v212, 0
    %v219 = vsel %vm214, %v213, 0
    %221 = vmatpush.bf16.msra.mxu0 0
    %222 = vmatpush.bf16.msra.mxu0 0
    %223 = vmatpush.bf16.msra.mxu0 0
    %224 = vmatpush.bf16.msra.mxu0 0
    %225 = vmatpush.bf16.msra.mxu0 %v179
    %226 = vmatpush.bf16.msra.mxu0 %v178
    %227 = vmatpush.bf16.msra.mxu0 %v177
    %228 = vmatpush.bf16.msra.mxu0 %v176
    %229 = vmatmul.bf16.gmra.mxu0 %v216
    %v230 = vpop.f32.mrf.mxu0
    %v231 = vadd.f32 %v187, %v230
    %v232 = vpop.f32.mrf.mxu0
    %v233 = vadd.f32 %v192, %v232
    %234 = vmatmul.bf16.gmra.mxu0 %v219
    %v235 = vpop.f32.mrf.mxu0
    %v236 = vadd.f32 %v197, %v235
    %v237 = vpop.f32.mrf.mxu0
    %v238 = vadd.f32 %v202, %v237
    %239 = vdwg.mxu0
    %v240 = vmax.f32 %v231, 0.0
    %v241 = vmax.f32 %v233, 0.0
    %v242 = vmax.f32 %v236, 0.0
    %v243 = vmax.f32 %v238, 0.0
    %v244 = vld [vmem:[%s5] sm:$0x1]
    %v245 = vpack.c.bf16 %v241, %v240
    %v246 = vpack.c.bf16 %v243, %v242
    %v247 = vld [vmem:[#allocation2] sm:$0x1]
    %249 = vset.pattern.permute.xlu0 0
    %250 = vperm.xlu0 %249, %v247
    %v251 = vpop.permute.xlu0 %250
    %v253 = vperm.slane %v251, 0
    %v255 = vsel %vm122, %v244, 0
    %257 = vmatpush.bf16.msra.mxu0 0
    %258 = vmatpush.bf16.msra.mxu0 0
    %259 = vmatpush.bf16.msra.mxu0 0
    %260 = vmatpush.bf16.msra.mxu0 0
    %261 = vmatpush.bf16.msra.mxu0 0
    %262 = vmatpush.bf16.msra.mxu0 0
    %263 = vmatpush.bf16.msra.mxu0 %v246
    %264 = vmatpush.bf16.msra.mxu0 %v245
    %265 = vmatmul.bf16.gmra.mxu0 %v255
    %v266 = vpop.f32.mrf.mxu0
    %v267 = vadd.f32 %v253, %v266
    %v268 = vpop.f32.mrf.mxu0
    %269 = vdwg.mxu0
    %v270 = vsub.f32 0.0, %v267
    %v271 = vmul.f32 %v270, 1.442695
    %v272 = vpow.pop %v271
    %v273 = vadd.f32 %v272, 1.0
    %v274 = vrcp.pop %v273
    %v275 = vmul.f32 %v273, %v274
    %v276 = vsub.f32 1.0, %v275
    %v277 = vmul.f32 %v274, %v276
    %v278 = vadd.f32 %v274, %v277
    %vm279 = vweird.f32 %v273
    %vm280 = vweird.f32 %v274
    %vm281 = vmor %vm279, %vm280
    %v282 = vsel %vm281, %v274, %v278
    %v283 = vand.u32 2147483647, %v273
    %vm284 = vcmp.eq.f32.partialorder %v283, 8.507059e+37
    %v285 = vand.u32 %v273, 2147483648
    %v286 = vor.u32 1.1754944e-38, %v285
    %v287 = vsel %vm284, %v286, %v282
    %v288 = vmul.f32 1.0, %v287
    %vm289 = vcmask 57344
    %290 = vst.msk [vmem:[#allocation3] sm:$0x1] %vm289, %v288
    // Predicated region
    $region30: #{tpu_custom_call.1} parent=1 // pred_check
      _
    $region31: #{tpu_custom_call.1} parent=1 // pred_check_branch
      %292 = sbr.rel (0) target = $region33
    $region32: #{tpu_custom_call.1} parent=1 // pred_region
      %294 = vsyncadd [#allocation4], 0
      %s296 = sshll.u32 [#allocation3], 4
      %s297 = int_to_ptr.vmem [resolvable:$true] %s296
      %s298 = sshll.u32 %s7, 4
      %s299 = int_to_ptr.hbm [resolvable:$true] %s298
      %301 = dma.vmem_to_hbm [thread:$0]  %s297, 16, %s299, [#allocation4]
    $region33: #{tpu_custom_call.1} parent=1 // pred_fallthru
      _
    // Predicated region
    $region34: #{tpu_custom_call.1} parent=1 // pred_check
      _
    $region35: #{tpu_custom_call.1} parent=1 // pred_check_branch
      %303 = sbr.rel (0) target = $region37
    $region36: #{tpu_custom_call.1} parent=1 // pred_region
      %305 = dma.done [#allocation4], 16
    $region37: #{tpu_custom_call.1} parent=1 // pred_fallthru
      _
    %306 = vsyncpa [#allocation4], 1

</llo_original>
